<compile_context>
chip_gen: v7x
topology: tpu7x:2x2x1
jax: 0.10.0
libtpu: 0.0.40
codegen_flags: <defaults>
</compile_context>

<pallas_src>
import functools

import jax
import jax.numpy as jnp
from jax import lax
from jax.experimental import pallas as pl
from jax.experimental.pallas import tpu as pltpu


def _masked_contract(mask_bool, values):
    """sum_k mask[., k] * values[k, .] on the MXU, accumulated in f32.

    The mask operand is 0/1 (exact in bf16).  float32 `values` are split into
    bf16 hi + lo parts so the contraction is accurate (~2^-17 relative)
    regardless of how f32 MXU operands would be handled; bf16 values go
    through directly (exact).
    """
    m16 = mask_bool.astype(jnp.bfloat16)
    if values.dtype == jnp.float32:
        hi = values.astype(jnp.bfloat16)
        lo = (values - hi.astype(jnp.float32)).astype(jnp.bfloat16)
        return (jnp.dot(m16, hi, preferred_element_type=jnp.float32)
                + jnp.dot(m16, lo, preferred_element_type=jnp.float32))
    return jnp.dot(m16.astype(values.dtype), values,
                   preferred_element_type=jnp.float32)


def _sloss_kernel(pad_index, n_rows, logits_ref, targets_ref, sum_ref, cnt_ref):
    p = pl.program_id(0)
    s = pl.program_id(1)

    @pl.when(s == 0)
    def _():
        sum_ref[...] = jnp.zeros_like(sum_ref)
        cnt_ref[...] = jnp.zeros_like(cnt_ref)

    logits = logits_ref[...]                       # (tm, C), native dtype
    tm, C = logits.shape
    tgt = targets_ref[...].reshape(1, tm)          # (1, tm) int32, lane-dense

    # Nominal global row range of this block.  The logits index_map clamps the
    # DMA so it never starts out of bounds; rows >= n_rows are masked here.
    block_start = (p * pl.num_programs(1) + s) * tm
    rows_col = block_start + lax.broadcasted_iota(jnp.int32, (tm, 1), 0)
    rows_lane = block_start + lax.broadcasted_iota(jnp.int32, (1, tm), 1)
    in_range_col = rows_col < n_rows                                   # (tm, 1)
    valid_lane = jnp.logical_and(tgt != pad_index, rows_lane < n_rows)  # (1, tm)

    # Row-wise logsumexp: max in native dtype (exact), exp/log/sums in f32.
    m = jnp.max(logits, axis=-1, keepdims=True)                        # (tm, 1)
    ex = jnp.exp(logits.astype(jnp.float32) - m.astype(jnp.float32))   # (tm, C)
    lse = m.astype(jnp.float32) + jnp.log(
        jnp.sum(ex, axis=-1, keepdims=True))                           # (tm, 1)
    lse = jnp.where(in_range_col, lse, 0.0)        # garbage tail rows -> finite 0

    # sum over valid rows of lse: lane-dense valid vector . lse, on the MXU.
    sum_lse = _masked_contract(valid_lane, lse)                         # (1, 1)

    # sum over valid rows of logits[r, targets[r]]:
    #   trace(onehot_valid^T @ logits); the one-hot is built lane-dense, so no
    #   per-sublane relayout of the targets is needed.
    class_iota = lax.broadcasted_iota(jnp.int32, (C, tm), 0)
    onehot_t = jnp.logical_and(class_iota == tgt, valid_lane)           # (C, tm)
    logits_mm = jnp.where(in_range_col, logits, 0)  # sanitize undefined tail rows
    d = _masked_contract(onehot_t, logits_mm)                           # (C, C)
    diag = (lax.broadcasted_iota(jnp.int32, (C, C), 0)
            == lax.broadcasted_iota(jnp.int32, (C, C), 1))
    sum_tgt = jnp.sum(jnp.where(diag, d, 0.0), keepdims=True)           # (1, 1)

    cnt = jnp.sum(valid_lane.astype(jnp.float32), keepdims=True)        # (1, 1)

    sum_ref[...] += (sum_lse - sum_tgt).reshape(1, 1, 1)
    cnt_ref[...] += cnt.reshape(1, 1, 1)


def _is_v7x():
    try:
        kind = jax.devices()[0].device_kind.lower()
    except Exception:
        return False
    return "7" in kind


def sloss(logits, targets, pad_index=0, *, tile_rows=None, num_row_splits=None,
          block_bytes=None, max_tile_rows=None, vmem_limit_bytes=None):
    """Masked mean cross-entropy (SLoss) on TPU.

    logits: (B, T, C) float (any dtype, streamed natively); targets: (B, T) int.
    Returns scalar f32 mean cross-entropy over tokens with targets != pad_index.
    Precondition: non-pad targets lie in [0, C).  If every token is pad the
    result is NaN (0/0), matching torch's mean reduction on an empty selection.
    """
    B, T, C = logits.shape
    N = B * T

    v7x = _is_v7x()
    if num_row_splits is None:
        num_row_splits = 2 if v7x else 1          # = TensorCores per chip
    if block_bytes is None:
        block_bytes = (2 if v7x else 6) * 1024 * 1024
    if max_tile_rows is None:
        max_tile_rows = 2048 if v7x else 4096
    if vmem_limit_bytes is None:
        vmem_limit_bytes = (32 if v7x else 64) * 1024 * 1024

    P = max(int(num_row_splits), 1)
    itemsize = jnp.dtype(logits.dtype).itemsize
    if tile_rows is None:
        rows = block_bytes // max(1, C * itemsize)
        rows = max(128, min(rows, max_tile_rows))
        per_split = -(-N // P)
        per_split = -(-per_split // 128) * 128    # round up to 128-row granules
        rows = min(rows, max(per_split, 128))
        tile_rows = max((rows // 128) * 128, 128)
    else:
        tile_rows = max((int(tile_rows) // 128) * 128, 128)

    nb_real = -(-N // tile_rows)                  # blocks actually covering data
    nb = -(-nb_real // P) * P                     # each split gets S whole blocks
    S = nb // P
    last_blk = nb_real - 1

    logits2d = logits.reshape(N, C)               # streamed as-is: no pad/upcast
    tgt_flat = targets.reshape(N).astype(jnp.int32)
    pad = nb * tile_rows - N
    if pad:                                       # only the tiny targets padded
        tgt_flat = jnp.pad(tgt_flat, (0, pad), constant_values=pad_index)
    targets3d = tgt_flat.reshape(nb, 1, tile_rows)  # lane-dense target blocks

    kernel = functools.partial(_sloss_kernel, pad_index, N)
    partial_sum, partial_cnt = pl.pallas_call(
        kernel,
        out_shape=(
            jax.ShapeDtypeStruct((P, 1, 1), jnp.float32),
            jax.ShapeDtypeStruct((P, 1, 1), jnp.float32),
        ),
        grid_spec=pltpu.PrefetchScalarGridSpec(
            num_scalar_prefetch=0,
            grid=(P, S),
            in_specs=[
                # Clamp so a (possibly phantom) trailing block never starts past
                # N; the kernel masks rows >= N so clamped data never contributes.
                pl.BlockSpec((tile_rows, C),
                             lambda p, s: (jnp.minimum(p * S + s, last_blk), 0)),
                pl.BlockSpec((1, 1, tile_rows), lambda p, s: (p * S + s, 0, 0)),
            ],
            out_specs=[
                pl.BlockSpec((1, 1, 1), lambda p, s: (p, 0, 0)),
                pl.BlockSpec((1, 1, 1), lambda p, s: (p, 0, 0)),
            ],
        ),
        compiler_params=pltpu.CompilerParams(
            dimension_semantics=("parallel", "arbitrary"),
            vmem_limit_bytes=vmem_limit_bytes,
        ),
    )(logits2d, targets3d)

    return jnp.sum(partial_sum) / jnp.sum(partial_cnt)


def _reference_sloss(logits, targets, pad_index=0):
    # Pure-JAX reference mirroring torch.nn.functional.cross_entropy on masked rows.
    B, T, C = logits.shape
    lg = logits.reshape(-1, C).astype(jnp.float32)
    tg = targets.reshape(-1)
    valid = tg != pad_index
    lse = jax.nn.logsumexp(lg, axis=-1)
    tgt_logit = jnp.take_along_axis(lg, tg[:, None], axis=-1)[:, 0]
    per = lse - tgt_logit
    return jnp.sum(jnp.where(valid, per, 0.0)) / jnp.sum(valid.astype(jnp.float32))


if __name__ == "__main__":
    key = jax.random.PRNGKey(0)
    ks = jax.random.split(key, 9)
    pad_index = 0

    # Case 1: small f32 logits, single block (ragged tail inside one block).
    B, T, C = 2, 8, 32
    logits = jax.random.normal(ks[0], (B, T, C), dtype=jnp.float32)
    targets = jax.random.randint(ks[1], (B, T), 1, C, dtype=jnp.int32)
    pad_mask = jax.random.bernoulli(ks[2], p=0.3, shape=(B, T))
    targets = jnp.where(pad_mask, 0, targets)
    targets = targets.at[0, 0].set(5)             # guarantee >= 1 valid token
    loss = jax.block_until_ready(sloss(logits, targets, pad_index=pad_index))
    ref = _reference_sloss(logits, targets, pad_index=pad_index)
    assert jnp.allclose(loss, ref, rtol=1e-4, atol=1e-5), (loss, ref)

    # Case 2: ragged row count + bf16 logits (native-dtype streaming path).
    B2, T2, C2 = 4, 37, 21
    logits2 = jax.random.normal(ks[3], (B2, T2, C2), jnp.float32).astype(jnp.bfloat16)
    targets2 = jax.random.randint(ks[4], (B2, T2), 1, C2, dtype=jnp.int32)
    pad_mask2 = jax.random.bernoulli(ks[5], p=0.3, shape=(B2, T2))
    targets2 = jnp.where(pad_mask2, 0, targets2)
    targets2 = targets2.at[0, 0].set(3)
    loss2 = jax.block_until_ready(sloss(logits2, targets2, pad_index=pad_index))
    ref2 = _reference_sloss(logits2, targets2, pad_index=pad_index)
    assert jnp.allclose(loss2, ref2, rtol=1e-3, atol=1e-3), (loss2, ref2)

    # Case 3: multi-block grid with forced 2 row-splits (exercises accumulation
    # across grid steps, the clamped index_map and a fully-masked phantom block).
    B3, T3, C3 = 3, 100, 7
    logits3 = jax.random.normal(ks[6], (B3, T3, C3), dtype=jnp.float32)
    targets3 = jax.random.randint(ks[7], (B3, T3), 1, C3, dtype=jnp.int32)
    pad_mask3 = jax.random.bernoulli(ks[8], p=0.4, shape=(B3, T3))
    targets3 = jnp.where(pad_mask3, 0, targets3)
    targets3 = targets3.at[0, 0].set(2)
    loss3 = jax.block_until_ready(
        sloss(logits3, targets3, pad_index=pad_index, tile_rows=128,
              num_row_splits=2))
    ref3 = _reference_sloss(logits3, targets3, pad_index=pad_index)
    assert jnp.allclose(loss3, ref3, rtol=1e-4, atol=1e-5), (loss3, ref3)

    print("KERNEL_OK")
</pallas_src>

<mosaic_0001>
module attributes {stable_mosaic.version = 11 : i64} {
  func.func @_sloss_kernel(%arg0: i32, %arg1: i32, %arg2: memref<128x32xf32, #tpu.memory_space<vmem>>, %arg3: memref<1x1x128xi32, #tpu.memory_space<vmem>>, %arg4: memref<1x1x1xf32, #tpu.memory_space<vmem>>, %arg5: memref<1x1x1xf32, #tpu.memory_space<vmem>>) attributes {dimension_semantics = [#tpu.dimension_semantics<parallel>, #tpu.dimension_semantics<arbitrary>], iteration_bounds = array<i64: 1, 1>, scalar_prefetch = 0 : i64, scratch_operands = 0 : i64, tpu.core_type = #tpu.core_type<tc>, window_params = [{transform_indices = @transform_0, window_bounds = array<i64: 128, 32>}, {transform_indices = @transform_1, window_bounds = array<i64: 1, 1, 128>}, {transform_indices = @transform_2, window_bounds = array<i64: 1, 1, 1>}, {transform_indices = @transform_3, window_bounds = array<i64: 1, 1, 1>}]} {
    %c0_i32 = arith.constant 0 : i32
    %0 = arith.cmpi eq, %arg1, %c0_i32 : i32
    %1 = arith.extui %0 : i1 to i32
    %c0_i32_0 = arith.constant 0 : i32
    %2 = arith.cmpi ne, %1, %c0_i32_0 : i32
    scf.if %2 {
      %cst_29 = arith.constant 0.000000e+00 : f32
      %89 = vector.broadcast %cst_29 : f32 to vector<1x1x1xf32>
      %c0_30 = arith.constant 0 : index
      %c0_31 = arith.constant 0 : index
      %c0_32 = arith.constant 0 : index
      %90 = vector.load %arg4[%c0_30, %c0_31, %c0_32] : memref<1x1x1xf32, #tpu.memory_space<vmem>>, vector<1x1x1xf32>
      tpu.vector_store %arg4[%c0_30, %c0_31, %c0_32], %89 {strides = array<i32>} : memref<1x1x1xf32, #tpu.memory_space<vmem>>, vector<1x1x1xf32>,
      %cst_33 = arith.constant 0.000000e+00 : f32
      %91 = vector.broadcast %cst_33 : f32 to vector<1x1x1xf32>
      %c0_34 = arith.constant 0 : index
      %c0_35 = arith.constant 0 : index
      %c0_36 = arith.constant 0 : index
      %92 = vector.load %arg5[%c0_34, %c0_35, %c0_36] : memref<1x1x1xf32, #tpu.memory_space<vmem>>, vector<1x1x1xf32>
      tpu.vector_store %arg5[%c0_34, %c0_35, %c0_36], %91 {strides = array<i32>} : memref<1x1x1xf32, #tpu.memory_space<vmem>>, vector<1x1x1xf32>,
    } else {
    }
    %c0 = arith.constant 0 : index
    %c0_1 = arith.constant 0 : index
    %3 = vector.load %arg2[%c0, %c0_1] : memref<128x32xf32, #tpu.memory_space<vmem>>, vector<128x32xf32>
    %c0_2 = arith.constant 0 : index
    %c0_3 = arith.constant 0 : index
    %c0_4 = arith.constant 0 : index
    %4 = vector.load %arg3[%c0_2, %c0_3, %c0_4] : memref<1x1x128xi32, #tpu.memory_space<vmem>>, vector<1x1x128xi32>
    %5 = vector.shape_cast %4 : vector<1x1x128xi32> to vector<1x128xi32>
    %c1_i32 = arith.constant 1 : i32
    %6 = arith.muli %arg0, %c1_i32 : i32
    %7 = arith.addi %6, %arg1 : i32
    %c128_i32 = arith.constant 128 : i32
    %8 = arith.muli %7, %c128_i32 : i32
    %9 = tpu.iota {dimensions = array<i32: 0>} : vector<128x1xi32>
    %10 = vector.broadcast %8 : i32 to vector<128x1xi32>
    %11 = arith.addi %10, %9 : vector<128x1xi32>
    %12 = tpu.iota {dimensions = array<i32: 1>} : vector<1x128xi32>
    %13 = vector.broadcast %8 : i32 to vector<1x128xi32>
    %14 = arith.addi %13, %12 : vector<1x128xi32>
    %c16_i32 = arith.constant 16 : i32
    %15 = vector.broadcast %c16_i32 : i32 to vector<128x1xi32>
    %16 = arith.cmpi slt, %11, %15 : vector<128x1xi32>
    %c0_i32_5 = arith.constant 0 : i32
    %17 = vector.broadcast %c0_i32_5 : i32 to vector<1x128xi32>
    %18 = arith.cmpi ne, %5, %17 : vector<1x128xi32>
    %c16_i32_6 = arith.constant 16 : i32
    %19 = vector.broadcast %c16_i32_6 : i32 to vector<1x128xi32>
    %20 = arith.cmpi slt, %14, %19 : vector<1x128xi32>
    %21 = arith.andi %18, %20 : vector<1x128xi1>
    %cst = arith.constant dense<0xFF800000> : vector<128xf32>
    %22 = vector.multi_reduction <maximumf>, %3, %cst [1] : vector<128x32xf32> to vector<128xf32>
    %23 = vector.shape_cast %22 : vector<128xf32> to vector<128x1xf32>
    %24 = vector.broadcast %23 : vector<128x1xf32> to vector<128x32xf32>
    %25 = arith.subf %3, %24 : vector<128x32xf32>
    %26 = math.exp %25 : vector<128x32xf32>
    %cst_7 = arith.constant dense<0.000000e+00> : vector<128xf32>
    %27 = vector.multi_reduction <add>, %26, %cst_7 [1] : vector<128x32xf32> to vector<128xf32>
    %28 = vector.shape_cast %27 : vector<128xf32> to vector<128x1xf32>
    %29 = math.log %28 : vector<128x1xf32>
    %30 = arith.addf %23, %29 : vector<128x1xf32>
    %cst_8 = arith.constant 0.000000e+00 : f32
    %31 = vector.broadcast %cst_8 : f32 to vector<128x1xf32>
    %32 = arith.select %16, %30, %31 : vector<128x1xi1>, vector<128x1xf32>
    %33 = arith.extui %21 : vector<1x128xi1> to vector<1x128xi32>
    %34 = arith.sitofp %33 : vector<1x128xi32> to vector<1x128xf32>
    %35 = arith.truncf %34 : vector<1x128xf32> to vector<1x128xbf16>
    %36 = arith.truncf %32 : vector<128x1xf32> to vector<128x1xbf16>
    %37 = arith.extf %36 : vector<128x1xbf16> to vector<128x1xf32>
    %38 = arith.subf %32, %37 : vector<128x1xf32>
    %39 = arith.truncf %38 : vector<128x1xf32> to vector<128x1xbf16>
    %cst_9 = arith.constant dense<0.000000e+00> : vector<1x1xf32>
    %40 = tpu.matmul %35, %36, %cst_9 {dimension_numbers = #tpu.dot_dimension_numbers<[1], [0], [0], [1], [0, 0, 1, 1], [], []>} : vector<1x128xbf16>, vector<128x1xbf16>, vector<1x1xf32> -> vector<1x1xf32>
    %cst_10 = arith.constant dense<0.000000e+00> : vector<1x1xf32>
    %41 = tpu.matmul %35, %39, %cst_10 {dimension_numbers = #tpu.dot_dimension_numbers<[1], [0], [0], [1], [0, 0, 1, 1], [], []>} : vector<1x128xbf16>, vector<128x1xbf16>, vector<1x1xf32> -> vector<1x1xf32>
    %42 = arith.addf %40, %41 : vector<1x1xf32>
    %43 = tpu.iota {dimensions = array<i32: 0>} : vector<32x128xi32>
    %44 = vector.broadcast %5 : vector<1x128xi32> to vector<32x128xi32>
    %45 = arith.cmpi eq, %43, %44 : vector<32x128xi32>
    %46 = vector.broadcast %21 : vector<1x128xi1> to vector<32x128xi1>
    %47 = arith.andi %45, %46 : vector<32x128xi1>
    %c0_i32_11 = arith.constant 0 : i32
    %48 = arith.sitofp %c0_i32_11 : i32 to f32
    %49 = vector.shape_cast %16 : vector<128x1xi1> to vector<128x1xi1>
    %50 = vector.broadcast %49 : vector<128x1xi1> to vector<128x32xi1>
    %51 = vector.broadcast %48 : f32 to vector<128x32xf32>
    %52 = arith.select %50, %3, %51 : vector<128x32xi1>, vector<128x32xf32>
    %53 = arith.extui %47 : vector<32x128xi1> to vector<32x128xi32>
    %54 = arith.sitofp %53 : vector<32x128xi32> to vector<32x128xf32>
    %55 = arith.truncf %54 : vector<32x128xf32> to vector<32x128xbf16>
    %56 = arith.truncf %52 : vector<128x32xf32> to vector<128x32xbf16>
    %57 = arith.extf %56 : vector<128x32xbf16> to vector<128x32xf32>
    %58 = arith.subf %52, %57 : vector<128x32xf32>
    %59 = arith.truncf %58 : vector<128x32xf32> to vector<128x32xbf16>
    %cst_12 = arith.constant dense<0.000000e+00> : vector<32x32xf32>
    %60 = tpu.matmul %55, %56, %cst_12 {dimension_numbers = #tpu.dot_dimension_numbers<[1], [0], [0], [1], [0, 0, 1, 1], [], []>} : vector<32x128xbf16>, vector<128x32xbf16>, vector<32x32xf32> -> vector<32x32xf32>
    %cst_13 = arith.constant dense<0.000000e+00> : vector<32x32xf32>
    %61 = tpu.matmul %55, %59, %cst_13 {dimension_numbers = #tpu.dot_dimension_numbers<[1], [0], [0], [1], [0, 0, 1, 1], [], []>} : vector<32x128xbf16>, vector<128x32xbf16>, vector<32x32xf32> -> vector<32x32xf32>
    %62 = arith.addf %60, %61 : vector<32x32xf32>
    %63 = tpu.iota {dimensions = array<i32: 0>} : vector<32x32xi32>
    %64 = tpu.iota {dimensions = array<i32: 1>} : vector<32x32xi32>
    %65 = arith.cmpi eq, %63, %64 : vector<32x32xi32>
    %cst_14 = arith.constant 0.000000e+00 : f32
    %66 = vector.broadcast %cst_14 : f32 to vector<32x32xf32>
    %67 = arith.select %65, %62, %66 : vector<32x32xi1>, vector<32x32xf32>
    %68 = vector.shape_cast %67 : vector<32x32xf32> to vector<1x32x32xf32>
    %cst_15 = arith.constant dense<0.000000e+00> : vector<1xf32>
    %69 = vector.multi_reduction <add>, %68, %cst_15 [1, 2] : vector<1x32x32xf32> to vector<1xf32>
    %70 = vector.shape_cast %69 : vector<1xf32> to vector<1x1x1xf32>
    %71 = vector.extract %70[0, 0, 0] : f32 from vector<1x1x1xf32>
    %72 = vector.broadcast %71 : f32 to vector<1x1xf32>
    %73 = arith.extui %21 : vector<1x128xi1> to vector<1x128xi32>
    %74 = arith.sitofp %73 : vector<1x128xi32> to vector<1x128xf32>
    %75 = vector.shape_cast %74 : vector<1x128xf32> to vector<1x1x128xf32>
    %cst_16 = arith.constant dense<0.000000e+00> : vector<1xf32>
    %76 = vector.multi_reduction <add>, %75, %cst_16 [1, 2] : vector<1x1x128xf32> to vector<1xf32>
    %77 = vector.shape_cast %76 : vector<1xf32> to vector<1x1x1xf32>
    %78 = vector.extract %77[0, 0, 0] : f32 from vector<1x1x1xf32>
    %79 = vector.broadcast %78 : f32 to vector<1x1xf32>
    %c0_17 = arith.constant 0 : index
    %c0_18 = arith.constant 0 : index
    %c0_19 = arith.constant 0 : index
    %80 = vector.load %arg4[%c0_17, %c0_18, %c0_19] : memref<1x1x1xf32, #tpu.memory_space<vmem>>, vector<1x1x1xf32>
    %81 = arith.subf %42, %72 : vector<1x1xf32>
    %82 = vector.shape_cast %81 : vector<1x1xf32> to vector<1x1x1xf32>
    %83 = arith.addf %80, %82 : vector<1x1x1xf32>
    %c0_20 = arith.constant 0 : index
    %c0_21 = arith.constant 0 : index
    %c0_22 = arith.constant 0 : index
    %84 = vector.load %arg4[%c0_20, %c0_21, %c0_22] : memref<1x1x1xf32, #tpu.memory_space<vmem>>, vector<1x1x1xf32>
    tpu.vector_store %arg4[%c0_20, %c0_21, %c0_22], %83 {strides = array<i32>} : memref<1x1x1xf32, #tpu.memory_space<vmem>>, vector<1x1x1xf32>,
    %c0_23 = arith.constant 0 : index
    %c0_24 = arith.constant 0 : index
    %c0_25 = arith.constant 0 : index
    %85 = vector.load %arg5[%c0_23, %c0_24, %c0_25] : memref<1x1x1xf32, #tpu.memory_space<vmem>>, vector<1x1x1xf32>
    %86 = vector.shape_cast %79 : vector<1x1xf32> to vector<1x1x1xf32>
    %87 = arith.addf %85, %86 : vector<1x1x1xf32>
    %c0_26 = arith.constant 0 : index
    %c0_27 = arith.constant 0 : index
    %c0_28 = arith.constant 0 : index
    %88 = vector.load %arg5[%c0_26, %c0_27, %c0_28] : memref<1x1x1xf32, #tpu.memory_space<vmem>>, vector<1x1x1xf32>
    tpu.vector_store %arg5[%c0_26, %c0_27, %c0_28], %87 {strides = array<i32>} : memref<1x1x1xf32, #tpu.memory_space<vmem>>, vector<1x1x1xf32>,
    return
  }
  func.func @transform_0(%arg0: i32, %arg1: i32) -> (i32, i32) {
    %c1_i32 = arith.constant 1 : i32
    %0 = arith.muli %arg0, %c1_i32 : i32
    %1 = arith.addi %0, %arg1 : i32
    %c0_i32 = arith.constant 0 : i32
    %2 = arith.minsi %1, %c0_i32 : i32
    %c0_i32_0 = arith.constant 0 : i32
    %c0_i32_1 = arith.constant 0 : i32
    return %2, %c0_i32_0 : i32, i32
  }
  func.func @transform_1(%arg0: i32, %arg1: i32) -> (i32, i32, i32) {
    %c1_i32 = arith.constant 1 : i32
    %0 = arith.muli %arg0, %c1_i32 : i32
    %1 = arith.addi %0, %arg1 : i32
    %c0_i32 = arith.constant 0 : i32
    %c0_i32_0 = arith.constant 0 : i32
    %c0_i32_1 = arith.constant 0 : i32
    return %1, %c0_i32, %c0_i32_0 : i32, i32, i32
  }
  func.func @transform_2(%arg0: i32, %arg1: i32) -> (i32, i32, i32) {
    %c0_i32 = arith.constant 0 : i32
    %c0_i32_0 = arith.constant 0 : i32
    %c0_i32_1 = arith.constant 0 : i32
    return %arg0, %c0_i32, %c0_i32_0 : i32, i32, i32
  }
  func.func @transform_3(%arg0: i32, %arg1: i32) -> (i32, i32, i32) {
    %c0_i32 = arith.constant 0 : i32
    %c0_i32_0 = arith.constant 0 : i32
    %c0_i32_1 = arith.constant 0 : i32
    return %arg0, %c0_i32, %c0_i32_0 : i32, i32, i32
  }
}

</mosaic_0001>

<llo_original>
// kernel: tpu_custom_call.1
$region0: #{tpu_custom_call.1}
  #allocation0 [shape = 'u32[]', space=smem, size = 0x4, offset = 0x4, fixed_abs, tag = 'smem constant byte address 0x4 - core index']
  #allocation1 [shape = 'u32[144,128]{1,0:T(1,128)}', space=vmem, size = 0x12000, scoped, tag = 'internal scratch']
  %s0 = inlined_call_operand.hbm [shape: f32[16,32], index: 0, kind: input, shape index: {}]
  %s1 = inlined_call_operand.hbm [shape: s32[1,1,128], index: 1, kind: input, shape index: {}]
  %s2 = inlined_call_operand.hbm [shape: f32[1,1,1], index: 2, kind: output, shape index: {0}]
  %s3 = inlined_call_operand.hbm [shape: f32[1,1,1], index: 3, kind: output, shape index: {1}]
  %4 = xla_tuple %s2, %s3
  %s5 = sld [smem:[#allocation0]]
  $region38: #{tpu_custom_call.1} parent=0
    _
  %s7 = ssub.s32 1, %s5
  %s8 = scalar_select 0, %s7, %s5
  $region1: #{tpu_custom_call.1} parent=0
    #allocation2 [shape = 'u8[65536]{0}', space=vmem, size = 0x10000, scoped, tag = 'input window, operand 0, single buffered']
    #allocation3 [shape = 's32[1]{0}', space=sflag, size = 0x4, scoped, tag = 'scoped memory for tpu_custom_call.1']
    #allocation4 [shape = 's32[1]{0}', space=sflag, size = 0x4, scoped, tag = 'scoped memory for tpu_custom_call.1']
    #allocation5 [shape = 'u8[512]{0}', space=vmem, size = 0x400, scoped, tag = 'input window, operand 1, single buffered']
    #allocation6 [shape = 's32[1]{0}', space=sflag, size = 0x4, scoped, tag = 'scoped memory for tpu_custom_call.1']
    #allocation7 [shape = 'u8[512]{0}', space=vmem, size = 0x400, scoped, tag = 'output window, operand 0, single buffered']
    #allocation8 [shape = 'u8[512]{0}', space=vmem, size = 0x400, scoped, tag = 'output window, operand 1, single buffered']
    #allocation9 [shape = 's32[1]{0}', space=sflag, size = 0x4, scoped, tag = 'scoped memory for tpu_custom_call.1']
    %9 = vsyncpa [#allocation3], 0
    %10 = vsyncpa [#allocation6], 0
    %11 = vsyncpa [#allocation4], 0
    %12 = vsyncpa [#allocation9], 0
    // Predicated region
    $region2: #{tpu_custom_call.1} parent=1 // pred_check
      _
    $region3: #{tpu_custom_call.1} parent=1 // pred_check_branch
      %14 = sbr.rel (0) target = $region5
    $region4: #{tpu_custom_call.1} parent=1 // pred_region
      %s15 = sadd.s32 0, 0
      %p16 = scmp.lt.s32.totalorder %s15, 0
      %s17 = scalar_select %p16, %s15, 0
      %s18 = smul.u32 16, %s17
      %s19 = ssub.s32 2, %s18
      %s20 = smul.u32 128, %s19
      %s22 = ssub.s32 2048, %s20
      %23 = vsyncadd [#allocation3], %s22
      %p24 = scmp.ne.s32.totalorder 0, %s20
      %s25 = smul.addr %s18, 128
      %s26 = scalar_lea.hbm %s0, %s25
      %s27 = smul.u32 8, %s19
      %s28 = sshll.u32 [#allocation2], 4
      %s29 = int_to_ptr.vmem [resolvable:$true] %s28
      %s30 = sshll.u32 %s27, 4
      %34 = dma.hbm_to_vmem [thread:$0]  (%p24), %s26, %s30, %s29, [#allocation3], 128, 128, 8
    $region5: #{tpu_custom_call.1} parent=1 // pred_fallthru
      _
    // Predicated region
    $region6: #{tpu_custom_call.1} parent=1 // pred_check
      _
    $region7: #{tpu_custom_call.1} parent=1 // pred_check_branch
      %36 = sbr.rel (0) target = $region9
    $region8: #{tpu_custom_call.1} parent=1 // pred_region
      %s37 = sadd.s32 0, 0
      %s39 = ssub.s32 16, 16
      %40 = vsyncadd [#allocation6], %s39
      %s41 = smul.addr %s37, 16
      %s42 = scalar_lea.hbm %s1, %s41
      %s44 = sshll.u32 [#allocation5], 4
      %s45 = int_to_ptr.vmem [resolvable:$true] %s44
      %47 = dma.hbm_to_vmem [thread:$0]  %s42, 16, %s45, [#allocation6]
    $region9: #{tpu_custom_call.1} parent=1 // pred_fallthru
      _
    // Predicated region
    $region10: #{tpu_custom_call.1} parent=1 // pred_check
      _
    $region11: #{tpu_custom_call.1} parent=1 // pred_check_branch
      %49 = sbr.rel (0) target = $region13
    $region12: #{tpu_custom_call.1} parent=1 // pred_region
      %50 = dma.done [#allocation3], 2048
    $region13: #{tpu_custom_call.1} parent=1 // pred_fallthru
      _
    // Predicated region
    $region14: #{tpu_custom_call.1} parent=1 // pred_check
      _
    $region15: #{tpu_custom_call.1} parent=1 // pred_check_branch
      %52 = sbr.rel (0) target = $region17
    $region16: #{tpu_custom_call.1} parent=1 // pred_region
      %53 = dma.done [#allocation6], 16
    $region17: #{tpu_custom_call.1} parent=1 // pred_fallthru
      _
    %s54 = sadd.s32 0, 0
    %p55 = scmp.lt.s32.totalorder %s54, 0
    %s56 = scalar_select %p55, %s54, 0
    %s57 = smul.u32 16, %s56
    %s58 = ssub.s32 2, %s57
    %s59 = smul.u32 128, %s58
    %s60 = sadd.s32 0, 0
    %p62 = scmp.eq.s32.totalorder 0, 0
    // Predicated region
    $region18: #{tpu_custom_call.1} parent=1 // pred_check
      %p63 = pneg %p62
    $region19: #{tpu_custom_call.1} parent=1 // pred_check_branch
      %65 = sbr.rel (%p63) target = $region21
    $region20: #{tpu_custom_call.1} parent=1 // pred_region
      %vm66 = vcmask 0
      %67 = vst.msk [vmem:[#allocation7] sm:$0x1] %vm66, 0.0
      %68 = vst.msk [vmem:[#allocation8] sm:$0x1] %vm66, 0.0
    $region21: #{tpu_custom_call.1} parent=1 // pred_fallthru
      _
    %v69 = vld [vmem:[#allocation2] sm:$0xff]
    %v70 = vld [vmem:[#allocation2 + $0x8] sm:$0xff]
    %v71 = vld [vmem:[#allocation2 + $0x10] sm:$0xff]
    %v72 = vld [vmem:[#allocation2 + $0x18] sm:$0xff]
    %v73 = vld [vmem:[#allocation2 + $0x20] sm:$0xff]
    %v74 = vld [vmem:[#allocation2 + $0x28] sm:$0xff]
    %v75 = vld [vmem:[#allocation2 + $0x30] sm:$0xff]
    %v76 = vld [vmem:[#allocation2 + $0x38] sm:$0xff]
    %v77 = vld [vmem:[#allocation2 + $0x40] sm:$0xff]
    %v78 = vld [vmem:[#allocation2 + $0x48] sm:$0xff]
    %v79 = vld [vmem:[#allocation2 + $0x50] sm:$0xff]
    %v80 = vld [vmem:[#allocation2 + $0x58] sm:$0xff]
    %v81 = vld [vmem:[#allocation2 + $0x60] sm:$0xff]
    %v82 = vld [vmem:[#allocation2 + $0x68] sm:$0xff]
    %v83 = vld [vmem:[#allocation2 + $0x70] sm:$0xff]
    %v84 = vld [vmem:[#allocation2 + $0x78] sm:$0xff]
    %v85 = vld [vmem:[#allocation5] sm:$0x1]
    %s86 = sadd.s32 0, 0
    %s87 = smul.u32 %s86, 128
    %v88 = vlaneseq
    %v89 = vshrl.u32 %v88, 7
    %v90 = vadd.s32 %v89, 8
    %v91 = vadd.s32 %v89, 16
    %v92 = vadd.s32 %v89, 24
    %v93 = vadd.s32 %v89, 32
    %v94 = vadd.s32 %v89, 40
    %v95 = vadd.s32 %v89, 48
    %v96 = vadd.s32 %v89, 56
    %v97 = vadd.s32 %v89, 64
    %v98 = vadd.s32 %v89, 72
    %v99 = vadd.s32 %v89, 80
    %v100 = vadd.s32 %v89, 88
    %v101 = vadd.s32 %v89, 96
    %v102 = vadd.s32 %v89, 104
    %v103 = vadd.s32 %v89, 112
    %v104 = vadd.s32 %v89, 120
    %v105 = vstv %s87
    %v106 = vadd.s32 %v105, %v89
    %v107 = vadd.s32 %v105, %v90
    %v108 = vadd.s32 %v105, %v91
    %v109 = vadd.s32 %v105, %v92
    %v110 = vadd.s32 %v105, %v93
    %v111 = vadd.s32 %v105, %v94
    %v112 = vadd.s32 %v105, %v95
    %v113 = vadd.s32 %v105, %v96
    %v114 = vadd.s32 %v105, %v97
    %v115 = vadd.s32 %v105, %v98
    %v116 = vadd.s32 %v105, %v99
    %v117 = vadd.s32 %v105, %v100
    %v118 = vadd.s32 %v105, %v101
    %v119 = vadd.s32 %v105, %v102
    %v120 = vadd.s32 %v105, %v103
    %v121 = vadd.s32 %v105, %v104
    %v122 = vlaneseq
    %v123 = vand.u32 %v122, 127
    %v124 = vadd.s32 %v105, %v123
    %vm125 = vcmp.lt.s32.totalorder %v106, 16
    %vm126 = vcmp.lt.s32.totalorder %v107, 16
    %vm127 = vcmp.lt.s32.totalorder %v108, 16
    %vm128 = vcmp.lt.s32.totalorder %v109, 16
    %vm129 = vcmp.lt.s32.totalorder %v110, 16
    %vm130 = vcmp.lt.s32.totalorder %v111, 16
    %vm131 = vcmp.lt.s32.totalorder %v112, 16
    %vm132 = vcmp.lt.s32.totalorder %v113, 16
    %vm133 = vcmp.lt.s32.totalorder %v114, 16
    %vm134 = vcmp.lt.s32.totalorder %v115, 16
    %vm135 = vcmp.lt.s32.totalorder %v116, 16
    %vm136 = vcmp.lt.s32.totalorder %v117, 16
    %vm137 = vcmp.lt.s32.totalorder %v118, 16
    %vm138 = vcmp.lt.s32.totalorder %v119, 16
    %vm139 = vcmp.lt.s32.totalorder %v120, 16
    %vm140 = vcmp.lt.s32.totalorder %v121, 16
    %vm141 = vcmp.ne.s32.totalorder %v85, 0
    %vm142 = vcmp.lt.s32.totalorder %v124, 16
    %vm143 = vmand %vm141, %vm142
    %vm144 = vcmask 261120
    %v145 = vsel %vm144, %v69, -inf
    %146 = vmax.xlane.f32.xlu0 %v145
    %v147 = vpop.xlane.xlu0 %146
    %v148 = vsel %vm144, %v70, -inf
    %149 = vmax.xlane.f32.xlu0 %v148
    %v150 = vpop.xlane.xlu0 %149
    %v151 = vsel %vm144, %v71, -inf
    %152 = vmax.xlane.f32.xlu0 %v151
    %v153 = vpop.xlane.xlu0 %152
    %v154 = vsel %vm144, %v72, -inf
    %155 = vmax.xlane.f32.xlu0 %v154
    %v156 = vpop.xlane.xlu0 %155
    %v157 = vsel %vm144, %v73, -inf
    %158 = vmax.xlane.f32.xlu0 %v157
    %v159 = vpop.xlane.xlu0 %158
    %v160 = vsel %vm144, %v74, -inf
    %161 = vmax.xlane.f32.xlu0 %v160
    %v162 = vpop.xlane.xlu0 %161
    %v163 = vsel %vm144, %v75, -inf
    %164 = vmax.xlane.f32.xlu0 %v163
    %v165 = vpop.xlane.xlu0 %164
    %v166 = vsel %vm144, %v76, -inf
    %167 = vmax.xlane.f32.xlu0 %v166
    %v168 = vpop.xlane.xlu0 %167
    %v169 = vsel %vm144, %v77, -inf
    %170 = vmax.xlane.f32.xlu0 %v169
    %v171 = vpop.xlane.xlu0 %170
    %v172 = vsel %vm144, %v78, -inf
    %173 = vmax.xlane.f32.xlu0 %v172
    %v174 = vpop.xlane.xlu0 %173
    %v175 = vsel %vm144, %v79, -inf
    %176 = vmax.xlane.f32.xlu0 %v175
    %v177 = vpop.xlane.xlu0 %176
    %v178 = vsel %vm144, %v80, -inf
    %179 = vmax.xlane.f32.xlu0 %v178
    %v180 = vpop.xlane.xlu0 %179
    %v181 = vsel %vm144, %v81, -inf
    %182 = vmax.xlane.f32.xlu0 %v181
    %v183 = vpop.xlane.xlu0 %182
    %v184 = vsel %vm144, %v82, -inf
    %185 = vmax.xlane.f32.xlu0 %v184
    %v186 = vpop.xlane.xlu0 %185
    %v187 = vsel %vm144, %v83, -inf
    %188 = vmax.xlane.f32.xlu0 %v187
    %v189 = vpop.xlane.xlu0 %188
    %v190 = vsel %vm144, %v84, -inf
    %191 = vmax.xlane.f32.xlu0 %v190
    %v192 = vpop.xlane.xlu0 %191
    %v193 = vsub.f32 %v69, %v147
    %v194 = vsub.f32 %v70, %v150
    %v195 = vsub.f32 %v71, %v153
    %v196 = vsub.f32 %v72, %v156
    %v197 = vsub.f32 %v73, %v159
    %v198 = vsub.f32 %v74, %v162
    %v199 = vsub.f32 %v75, %v165
    %v200 = vsub.f32 %v76, %v168
    %v201 = vsub.f32 %v77, %v171
    %v202 = vsub.f32 %v78, %v174
    %v203 = vsub.f32 %v79, %v177
    %v204 = vsub.f32 %v80, %v180
    %v205 = vsub.f32 %v81, %v183
    %v206 = vsub.f32 %v82, %v186
    %v207 = vsub.f32 %v83, %v189
    %v208 = vsub.f32 %v84, %v192
    %v209 = vmul.f32 %v193, 1.442695
    %v210 = vpow.pop %v209
    %v211 = vmul.f32 %v194, 1.442695
    %v212 = vpow.pop %v211
    %v213 = vmul.f32 %v195, 1.442695
    %v214 = vpow.pop %v213
    %v215 = vmul.f32 %v196, 1.442695
    %v216 = vpow.pop %v215
    %v217 = vmul.f32 %v197, 1.442695
    %v218 = vpow.pop %v217
    %v219 = vmul.f32 %v198, 1.442695
    %v220 = vpow.pop %v219
    %v221 = vmul.f32 %v199, 1.442695
    %v222 = vpow.pop %v221
    %v223 = vmul.f32 %v200, 1.442695
    %v224 = vpow.pop %v223
    %v225 = vmul.f32 %v201, 1.442695
    %v226 = vpow.pop %v225
    %v227 = vmul.f32 %v202, 1.442695
    %v228 = vpow.pop %v227
    %v229 = vmul.f32 %v203, 1.442695
    %v230 = vpow.pop %v229
    %v231 = vmul.f32 %v204, 1.442695
    %v232 = vpow.pop %v231
    %v233 = vmul.f32 %v205, 1.442695
    %v234 = vpow.pop %v233
    %v235 = vmul.f32 %v206, 1.442695
    %v236 = vpow.pop %v235
    %v237 = vmul.f32 %v207, 1.442695
    %v238 = vpow.pop %v237
    %v239 = vmul.f32 %v208, 1.442695
    %v240 = vpow.pop %v239
    %v241 = vsel %vm144, %v210, 0.0
    %242 = vadd.xlane.f32.xlu0 %v241
    %v243 = vpop.xlane.xlu0 %242
    %v244 = vsel %vm144, %v212, 0.0
    %245 = vadd.xlane.f32.xlu0 %v244
    %v246 = vpop.xlane.xlu0 %245
    %v247 = vsel %vm144, %v214, 0.0
    %248 = vadd.xlane.f32.xlu0 %v247
    %v249 = vpop.xlane.xlu0 %248
    %v250 = vsel %vm144, %v216, 0.0
    %251 = vadd.xlane.f32.xlu0 %v250
    %v252 = vpop.xlane.xlu0 %251
    %v253 = vsel %vm144, %v218, 0.0
    %254 = vadd.xlane.f32.xlu0 %v253
    %v255 = vpop.xlane.xlu0 %254
    %v256 = vsel %vm144, %v220, 0.0
    %257 = vadd.xlane.f32.xlu0 %v256
    %v258 = vpop.xlane.xlu0 %257
    %v259 = vsel %vm144, %v222, 0.0
    %260 = vadd.xlane.f32.xlu0 %v259
    %v261 = vpop.xlane.xlu0 %260
    %v262 = vsel %vm144, %v224, 0.0
    %263 = vadd.xlane.f32.xlu0 %v262
    %v264 = vpop.xlane.xlu0 %263
    %v265 = vsel %vm144, %v226, 0.0
    %266 = vadd.xlane.f32.xlu0 %v265
    %v267 = vpop.xlane.xlu0 %266
    %v268 = vsel %vm144, %v228, 0.0
    %269 = vadd.xlane.f32.xlu0 %v268
    %v270 = vpop.xlane.xlu0 %269
    %v271 = vsel %vm144, %v230, 0.0
    %272 = vadd.xlane.f32.xlu0 %v271
    %v273 = vpop.xlane.xlu0 %272
    %v274 = vsel %vm144, %v232, 0.0
    %275 = vadd.xlane.f32.xlu0 %v274
    %v276 = vpop.xlane.xlu0 %275
    %v277 = vsel %vm144, %v234, 0.0
    %278 = vadd.xlane.f32.xlu0 %v277
    %v279 = vpop.xlane.xlu0 %278
    %v280 = vsel %vm144, %v236, 0.0
    %281 = vadd.xlane.f32.xlu0 %v280
    %v282 = vpop.xlane.xlu0 %281
    %v283 = vsel %vm144, %v238, 0.0
    %284 = vadd.xlane.f32.xlu0 %v283
    %v285 = vpop.xlane.xlu0 %284
    %v286 = vsel %vm144, %v240, 0.0
    %287 = vadd.xlane.f32.xlu0 %v286
    %v288 = vpop.xlane.xlu0 %287
    %v289 = vlog2.pop %v243
    %v290 = vmul.f32 %v289, 0.6931472
    %v291 = vlog2.pop %v246
    %v292 = vmul.f32 %v291, 0.6931472
    %v293 = vlog2.pop %v249
    %v294 = vmul.f32 %v293, 0.6931472
    %v295 = vlog2.pop %v252
    %v296 = vmul.f32 %v295, 0.6931472
    %v297 = vlog2.pop %v255
    %v298 = vmul.f32 %v297, 0.6931472
    %v299 = vlog2.pop %v258
    %v300 = vmul.f32 %v299, 0.6931472
    %v301 = vlog2.pop %v261
    %v302 = vmul.f32 %v301, 0.6931472
    %v303 = vlog2.pop %v264
    %v304 = vmul.f32 %v303, 0.6931472
    %v305 = vlog2.pop %v267
    %v306 = vmul.f32 %v305, 0.6931472
    %v307 = vlog2.pop %v270
    %v308 = vmul.f32 %v307, 0.6931472
    %v309 = vlog2.pop %v273
    %v310 = vmul.f32 %v309, 0.6931472
    %v311 = vlog2.pop %v276
    %v312 = vmul.f32 %v311, 0.6931472
    %v313 = vlog2.pop %v279
    %v314 = vmul.f32 %v313, 0.6931472
    %v315 = vlog2.pop %v282
    %v316 = vmul.f32 %v315, 0.6931472
    %v317 = vlog2.pop %v285
    %v318 = vmul.f32 %v317, 0.6931472
    %v319 = vlog2.pop %v288
    %v320 = vmul.f32 %v319, 0.6931472
    %v321 = vadd.f32 %v147, %v290
    %v322 = vadd.f32 %v150, %v292
    %v323 = vadd.f32 %v153, %v294
    %v324 = vadd.f32 %v156, %v296
    %v325 = vadd.f32 %v159, %v298
    %v326 = vadd.f32 %v162, %v300
    %v327 = vadd.f32 %v165, %v302
    %v328 = vadd.f32 %v168, %v304
    %v329 = vadd.f32 %v171, %v306
    %v330 = vadd.f32 %v174, %v308
    %v331 = vadd.f32 %v177, %v310
    %v332 = vadd.f32 %v180, %v312
    %v333 = vadd.f32 %v183, %v314
    %v334 = vadd.f32 %v186, %v316
    %v335 = vadd.f32 %v189, %v318
    %v336 = vadd.f32 %v192, %v320
    %v337 = vsel %vm125, %v321, 0.0
    %v338 = vsel %vm126, %v322, 0.0
    %v339 = vsel %vm127, %v323, 0.0
    %v340 = vsel %vm128, %v324, 0.0
    %v341 = vsel %vm129, %v325, 0.0
    %v342 = vsel %vm130, %v326, 0.0
    %v343 = vsel %vm131, %v327, 0.0
    %v344 = vsel %vm132, %v328, 0.0
    %v345 = vsel %vm133, %v329, 0.0
    %v346 = vsel %vm134, %v330, 0.0
    %v347 = vsel %vm135, %v331, 0.0
    %v348 = vsel %vm136, %v332, 0.0
    %v349 = vsel %vm137, %v333, 0.0
    %v350 = vsel %vm138, %v334, 0.0
    %v351 = vsel %vm139, %v335, 0.0
    %v352 = vsel %vm140, %v336, 0.0
    %v353 = vsel %vm143, 1, 0
    %v354 = vcvt.s32.f32 %v353
    %v355 = vpack.c.bf16 %v354, %v354
    %v356 = vpack.c.bf16 %v338, %v337
    %v357 = vpack.c.bf16 %v340, %v339
    %v358 = vpack.c.bf16 %v342, %v341
    %v359 = vpack.c.bf16 %v344, %v343
    %v360 = vpack.c.bf16 %v346, %v345
    %v361 = vpack.c.bf16 %v348, %v347
    %v362 = vpack.c.bf16 %v350, %v349
    %v363 = vpack.c.bf16 %v352, %v351
    %v364 = vunpack.c.l.bf16 %v356
    %v365 = vunpack.c.h.bf16 %v356
    %v366 = vunpack.c.l.bf16 %v357
    %v367 = vunpack.c.h.bf16 %v357
    %v368 = vunpack.c.l.bf16 %v358
    %v369 = vunpack.c.h.bf16 %v358
    %v370 = vunpack.c.l.bf16 %v359
    %v371 = vunpack.c.h.bf16 %v359
    %v372 = vunpack.c.l.bf16 %v360
    %v373 = vunpack.c.h.bf16 %v360
    %v374 = vunpack.c.l.bf16 %v361
    %v375 = vunpack.c.h.bf16 %v361
    %v376 = vunpack.c.l.bf16 %v362
    %v377 = vunpack.c.h.bf16 %v362
    %v378 = vunpack.c.l.bf16 %v363
    %v379 = vunpack.c.h.bf16 %v363
    %v380 = vsub.f32 %v337, %v364
    %v381 = vsub.f32 %v338, %v365
    %v382 = vsub.f32 %v339, %v366
    %v383 = vsub.f32 %v340, %v367
    %v384 = vsub.f32 %v341, %v368
    %v385 = vsub.f32 %v342, %v369
    %v386 = vsub.f32 %v343, %v370
    %v387 = vsub.f32 %v344, %v371
    %v388 = vsub.f32 %v345, %v372
    %v389 = vsub.f32 %v346, %v373
    %v390 = vsub.f32 %v347, %v374
    %v391 = vsub.f32 %v348, %v375
    %v392 = vsub.f32 %v349, %v376
    %v393 = vsub.f32 %v350, %v377
    %v394 = vsub.f32 %v351, %v378
    %v395 = vsub.f32 %v352, %v379
    %v396 = vpack.c.bf16 %v381, %v380
    %v397 = vpack.c.bf16 %v383, %v382
    %v398 = vpack.c.bf16 %v385, %v384
    %v399 = vpack.c.bf16 %v387, %v386
    %v400 = vpack.c.bf16 %v389, %v388
    %v401 = vpack.c.bf16 %v391, %v390
    %v402 = vpack.c.bf16 %v393, %v392
    %v403 = vpack.c.bf16 %v395, %v394
    %404 = vmatprep.subr.bf16.mxu0 0
    %405 = vmatpush1.bf16.msra.mxu0 %v396
    %406 = vmatprep.subr.bf16.mxu0 0
    %407 = vmatpush1.bf16.msra.mxu0 %v397
    %408 = vmatprep.subr.bf16.mxu0 0
    %409 = vmatpush1.bf16.msra.mxu0 %v398
    %410 = vmatprep.subr.bf16.mxu0 0
    %411 = vmatpush1.bf16.msra.mxu0 %v399
    %412 = vmatprep.subr.bf16.mxu0 0
    %413 = vmatpush1.bf16.msra.mxu0 %v400
    %414 = vmatprep.subr.bf16.mxu0 0
    %415 = vmatpush1.bf16.msra.mxu0 %v401
    %416 = vmatprep.subr.bf16.mxu0 0
    %417 = vmatpush1.bf16.msra.mxu0 %v402
    %418 = vmatprep.subr.bf16.mxu0 0
    %419 = vmatpush1.bf16.msra.mxu0 %v403
    %420 = vmatprep.subr.bf16.mxu0 0
    %421 = vmatpush1.bf16.msra.mxu0 0
    %422 = vmatprep.subr.bf16.mxu0 0
    %423 = vmatpush1.bf16.msra.mxu0 0
    %424 = vmatprep.subr.bf16.mxu0 0
    %425 = vmatpush1.bf16.msra.mxu0 0
    %426 = vmatprep.subr.bf16.mxu0 0
    %427 = vmatpush1.bf16.msra.mxu0 0
    %428 = vmatprep.subr.bf16.mxu0 0
    %429 = vmatpush1.bf16.msra.mxu0 0
    %430 = vmatprep.subr.bf16.mxu0 0
    %431 = vmatpush1.bf16.msra.mxu0 0
    %432 = vmatprep.subr.bf16.mxu0 0
    %433 = vmatpush1.bf16.msra.mxu0 0
    %434 = vmatprep.subr.bf16.mxu0 0
    %435 = vmatpush1.bf16.msra.mxu0 0
    %436 = vmatprep.mubr.bf16.mxu0 0
    %437 = vmatmul.mubr.bf16.gmra.mrb[0].mxu0 %v355
    %v438 = vpop.f32.mrb[0].mxu0
    %v439 = vadd.f32 0.0, %v438
    %v440 = vpop.f32.mrb[0].mxu0
    %v441 = vpop.f32.mrb[0].mxu0
    %v442 = vpop.f32.mrb[0].mxu0
    %443 = vdwg.mxu0
    %444 = vmatprep.subr.bf16.mxu0 0
    %445 = vmatpush1.bf16.msra.mxu0 %v356
    %446 = vmatprep.subr.bf16.mxu0 0
    %447 = vmatpush1.bf16.msra.mxu0 %v357
    %448 = vmatprep.subr.bf16.mxu0 0
    %449 = vmatpush1.bf16.msra.mxu0 %v358
    %450 = vmatprep.subr.bf16.mxu0 0
    %451 = vmatpush1.bf16.msra.mxu0 %v359
    %452 = vmatprep.subr.bf16.mxu0 0
    %453 = vmatpush1.bf16.msra.mxu0 %v360
    %454 = vmatprep.subr.bf16.mxu0 0
    %455 = vmatpush1.bf16.msra.mxu0 %v361
    %456 = vmatprep.subr.bf16.mxu0 0
    %457 = vmatpush1.bf16.msra.mxu0 %v362
    %458 = vmatprep.subr.bf16.mxu0 0
    %459 = vmatpush1.bf16.msra.mxu0 %v363
    %460 = vmatprep.subr.bf16.mxu0 0
    %461 = vmatpush1.bf16.msra.mxu0 0
    %462 = vmatprep.subr.bf16.mxu0 0
    %463 = vmatpush1.bf16.msra.mxu0 0
    %464 = vmatprep.subr.bf16.mxu0 0
    %465 = vmatpush1.bf16.msra.mxu0 0
    %466 = vmatprep.subr.bf16.mxu0 0
    %467 = vmatpush1.bf16.msra.mxu0 0
    %468 = vmatprep.subr.bf16.mxu0 0
    %469 = vmatpush1.bf16.msra.mxu0 0
    %470 = vmatprep.subr.bf16.mxu0 0
    %471 = vmatpush1.bf16.msra.mxu0 0
    %472 = vmatprep.subr.bf16.mxu0 0
    %473 = vmatpush1.bf16.msra.mxu0 0
    %474 = vmatprep.subr.bf16.mxu0 0
    %475 = vmatpush1.bf16.msra.mxu0 0
    %476 = vmatprep.mubr.bf16.mxu0 0
    %477 = vmatmul.mubr.bf16.gmra.mrb[0].mxu0 %v355
    %v478 = vpop.f32.mrb[0].mxu0
    %v479 = vadd.f32 %v439, %v478
    %v480 = vpop.f32.mrb[0].mxu0
    %v481 = vpop.f32.mrb[0].mxu0
    %v482 = vpop.f32.mrb[0].mxu0
    %483 = vdwg.mxu0
    %v484 = vlaneseq
    %v485 = vshrl.u32 %v484, 7
    %v486 = vsub.s32 0, %v485
    %v487 = vrot.slane %v85, %v486
    %vm488 = vcmp.eq.s32.totalorder %v89, %v487
    %vm489 = vcmp.eq.s32.totalorder %v90, %v487
    %vm490 = vcmp.eq.s32.totalorder %v91, %v487
    %vm491 = vcmp.eq.s32.totalorder %v92, %v487
    %v492 = vlaneseq
    %v493 = vshrl.u32 %v492, 7
    %v494 = vsub.s32 0, %v493
    %v495 = vrot.slane %v353, %v494
    %vm496 = vcmp.eq.s32.totalorder %v495, 1
    %vm497 = vmand %vm488, %vm496
    %vm498 = vmand %vm489, %vm496
    %vm499 = vmand %vm490, %vm496
    %vm500 = vmand %vm491, %vm496
    %v501 = vsel %vm125, 1, 0
    %v502 = vsel %vm126, 1, 0
    %v503 = vsel %vm127, 1, 0
    %v504 = vsel %vm128, 1, 0
    %v505 = vsel %vm129, 1, 0
    %v506 = vsel %vm130, 1, 0
    %v507 = vsel %vm131, 1, 0
    %v508 = vsel %vm132, 1, 0
    %v509 = vsel %vm133, 1, 0
    %v510 = vsel %vm134, 1, 0
    %v511 = vsel %vm135, 1, 0
    %v512 = vsel %vm136, 1, 0
    %v513 = vsel %vm137, 1, 0
    %v514 = vsel %vm138, 1, 0
    %v515 = vsel %vm139, 1, 0
    %v516 = vsel %vm140, 1, 0
    %vm517 = vcmp.eq.s32.totalorder %v501, 1
    %vm518 = vcmp.eq.s32.totalorder %v502, 1
    %vm519 = vcmp.eq.s32.totalorder %v503, 1
    %vm520 = vcmp.eq.s32.totalorder %v504, 1
    %vm521 = vcmp.eq.s32.totalorder %v505, 1
    %vm522 = vcmp.eq.s32.totalorder %v506, 1
    %vm523 = vcmp.eq.s32.totalorder %v507, 1
    %vm524 = vcmp.eq.s32.totalorder %v508, 1
    %vm525 = vcmp.eq.s32.totalorder %v509, 1
    %vm526 = vcmp.eq.s32.totalorder %v510, 1
    %vm527 = vcmp.eq.s32.totalorder %v511, 1
    %vm528 = vcmp.eq.s32.totalorder %v512, 1
    %vm529 = vcmp.eq.s32.totalorder %v513, 1
    %vm530 = vcmp.eq.s32.totalorder %v514, 1
    %vm531 = vcmp.eq.s32.totalorder %v515, 1
    %vm532 = vcmp.eq.s32.totalorder %v516, 1
    %v533 = vsel %vm517, %v69, 0.0
    %v534 = vsel %vm518, %v70, 0.0
    %v535 = vsel %vm519, %v71, 0.0
    %v536 = vsel %vm520, %v72, 0.0
    %v537 = vsel %vm521, %v73, 0.0
    %v538 = vsel %vm522, %v74, 0.0
    %v539 = vsel %vm523, %v75, 0.0
    %v540 = vsel %vm524, %v76, 0.0
    %v541 = vsel %vm525, %v77, 0.0
    %v542 = vsel %vm526, %v78, 0.0
    %v543 = vsel %vm527, %v79, 0.0
    %v544 = vsel %vm528, %v80, 0.0
    %v545 = vsel %vm529, %v81, 0.0
    %v546 = vsel %vm530, %v82, 0.0
    %v547 = vsel %vm531, %v83, 0.0
    %v548 = vsel %vm532, %v84, 0.0
    %v549 = vsel %vm497, 1, 0
    %v550 = vsel %vm498, 1, 0
    %v551 = vsel %vm499, 1, 0
    %v552 = vsel %vm500, 1, 0
    %v553 = vcvt.s32.f32 %v549
    %v554 = vcvt.s32.f32 %v550
    %v555 = vcvt.s32.f32 %v551
    %v556 = vcvt.s32.f32 %v552
    %v557 = vpack.c.bf16 %v554, %v553
    %v558 = vpack.c.bf16 %v556, %v555
    %v559 = vpack.c.bf16 %v534, %v533
    %v560 = vpack.c.bf16 %v536, %v535
    %v561 = vpack.c.bf16 %v538, %v537
    %v562 = vpack.c.bf16 %v540, %v539
    %v563 = vpack.c.bf16 %v542, %v541
    %v564 = vpack.c.bf16 %v544, %v543
    %v565 = vpack.c.bf16 %v546, %v545
    %v566 = vpack.c.bf16 %v548, %v547
    %v567 = vunpack.c.l.bf16 %v559
    %v568 = vunpack.c.h.bf16 %v559
    %v569 = vunpack.c.l.bf16 %v560
    %v570 = vunpack.c.h.bf16 %v560
    %v571 = vunpack.c.l.bf16 %v561
    %v572 = vunpack.c.h.bf16 %v561
    %v573 = vunpack.c.l.bf16 %v562
    %v574 = vunpack.c.h.bf16 %v562
    %v575 = vunpack.c.l.bf16 %v563
    %v576 = vunpack.c.h.bf16 %v563
    %v577 = vunpack.c.l.bf16 %v564
    %v578 = vunpack.c.h.bf16 %v564
    %v579 = vunpack.c.l.bf16 %v565
    %v580 = vunpack.c.h.bf16 %v565
    %v581 = vunpack.c.l.bf16 %v566
    %v582 = vunpack.c.h.bf16 %v566
    %v583 = vsub.f32 %v533, %v567
    %v584 = vsub.f32 %v534, %v568
    %v585 = vsub.f32 %v535, %v569
    %v586 = vsub.f32 %v536, %v570
    %v587 = vsub.f32 %v537, %v571
    %v588 = vsub.f32 %v538, %v572
    %v589 = vsub.f32 %v539, %v573
    %v590 = vsub.f32 %v540, %v574
    %v591 = vsub.f32 %v541, %v575
    %v592 = vsub.f32 %v542, %v576
    %v593 = vsub.f32 %v543, %v577
    %v594 = vsub.f32 %v544, %v578
    %v595 = vsub.f32 %v545, %v579
    %v596 = vsub.f32 %v546, %v580
    %v597 = vsub.f32 %v547, %v581
    %v598 = vsub.f32 %v548, %v582
    %v599 = vpack.c.bf16 %v584, %v583
    %v600 = vpack.c.bf16 %v586, %v585
    %v601 = vpack.c.bf16 %v588, %v587
    %v602 = vpack.c.bf16 %v590, %v589
    %v603 = vpack.c.bf16 %v592, %v591
    %v604 = vpack.c.bf16 %v594, %v593
    %v605 = vpack.c.bf16 %v596, %v595
    %v606 = vpack.c.bf16 %v598, %v597
    %607 = vmatprep.subr.bf16.mxu0 0
    %608 = vmatpush1.bf16.msra.mxu0 %v599
    %609 = vmatprep.subr.bf16.mxu0 0
    %610 = vmatpush1.bf16.msra.mxu0 %v600
    %611 = vmatprep.subr.bf16.mxu0 0
    %612 = vmatpush1.bf16.msra.mxu0 %v601
    %613 = vmatprep.subr.bf16.mxu0 0
    %614 = vmatpush1.bf16.msra.mxu0 %v602
    %615 = vmatprep.subr.bf16.mxu0 0
    %616 = vmatpush1.bf16.msra.mxu0 %v603
    %617 = vmatprep.subr.bf16.mxu0 0
    %618 = vmatpush1.bf16.msra.mxu0 %v604
    %619 = vmatprep.subr.bf16.mxu0 0
    %620 = vmatpush1.bf16.msra.mxu0 %v605
    %621 = vmatprep.subr.bf16.mxu0 0
    %622 = vmatpush1.bf16.msra.mxu0 %v606
    %623 = vmatprep.subr.bf16.mxu0 0
    %624 = vmatpush1.bf16.msra.mxu0 0
    %625 = vmatprep.subr.bf16.mxu0 0
    %626 = vmatpush1.bf16.msra.mxu0 0
    %627 = vmatprep.subr.bf16.mxu0 0
    %628 = vmatpush1.bf16.msra.mxu0 0
    %629 = vmatprep.subr.bf16.mxu0 0
    %630 = vmatpush1.bf16.msra.mxu0 0
    %631 = vmatprep.subr.bf16.mxu0 0
    %632 = vmatpush1.bf16.msra.mxu0 0
    %633 = vmatprep.subr.bf16.mxu0 0
    %634 = vmatpush1.bf16.msra.mxu0 0
    %635 = vmatprep.subr.bf16.mxu0 0
    %636 = vmatpush1.bf16.msra.mxu0 0
    %637 = vmatprep.subr.bf16.mxu0 0
    %638 = vmatpush1.bf16.msra.mxu0 0
    %639 = vmatprep.mubr.bf16.mxu0 0
    %640 = vmatmul.mubr.bf16.gmra.mrb[0].mxu0 %v557
    %v641 = vpop.f32.mrb[0].mxu0
    %v642 = vadd.f32 0.0, %v641
    %v643 = vpop.f32.mrb[0].mxu0
    %v644 = vpop.f32.mrb[0].mxu0
    %v645 = vadd.f32 0.0, %v644
    %v646 = vpop.f32.mrb[0].mxu0
    %647 = vmatprep.mubr.bf16.mxu0 0
    %648 = vmatmul.mubr.bf16.gmra.mrb[0].mxu0 %v558
    %v649 = vpop.f32.mrb[0].mxu0
    %v650 = vadd.f32 0.0, %v649
    %v651 = vpop.f32.mrb[0].mxu0
    %v652 = vpop.f32.mrb[0].mxu0
    %v653 = vadd.f32 0.0, %v652
    %v654 = vpop.f32.mrb[0].mxu0
    %655 = vdwg.mxu0
    %656 = vmatprep.subr.bf16.mxu0 0
    %657 = vmatpush1.bf16.msra.mxu0 %v559
    %658 = vmatprep.subr.bf16.mxu0 0
    %659 = vmatpush1.bf16.msra.mxu0 %v560
    %660 = vmatprep.subr.bf16.mxu0 0
    %661 = vmatpush1.bf16.msra.mxu0 %v561
    %662 = vmatprep.subr.bf16.mxu0 0
    %663 = vmatpush1.bf16.msra.mxu0 %v562
    %664 = vmatprep.subr.bf16.mxu0 0
    %665 = vmatpush1.bf16.msra.mxu0 %v563
    %666 = vmatprep.subr.bf16.mxu0 0
    %667 = vmatpush1.bf16.msra.mxu0 %v564
    %668 = vmatprep.subr.bf16.mxu0 0
    %669 = vmatpush1.bf16.msra.mxu0 %v565
    %670 = vmatprep.subr.bf16.mxu0 0
    %671 = vmatpush1.bf16.msra.mxu0 %v566
    %672 = vmatprep.subr.bf16.mxu0 0
    %673 = vmatpush1.bf16.msra.mxu0 0
    %674 = vmatprep.subr.bf16.mxu0 0
    %675 = vmatpush1.bf16.msra.mxu0 0
    %676 = vmatprep.subr.bf16.mxu0 0
    %677 = vmatpush1.bf16.msra.mxu0 0
    %678 = vmatprep.subr.bf16.mxu0 0
    %679 = vmatpush1.bf16.msra.mxu0 0
    %680 = vmatprep.subr.bf16.mxu0 0
    %681 = vmatpush1.bf16.msra.mxu0 0
    %682 = vmatprep.subr.bf16.mxu0 0
    %683 = vmatpush1.bf16.msra.mxu0 0
    %684 = vmatprep.subr.bf16.mxu0 0
    %685 = vmatpush1.bf16.msra.mxu0 0
    %686 = vmatprep.subr.bf16.mxu0 0
    %687 = vmatpush1.bf16.msra.mxu0 0
    %688 = vmatprep.mubr.bf16.mxu0 0
    %689 = vmatmul.mubr.bf16.gmra.mrb[0].mxu0 %v557
    %v690 = vpop.f32.mrb[0].mxu0
    %v691 = vadd.f32 %v642, %v690
    %v692 = vpop.f32.mrb[0].mxu0
    %v693 = vpop.f32.mrb[0].mxu0
    %v694 = vadd.f32 %v645, %v693
    %v695 = vpop.f32.mrb[0].mxu0
    %696 = vmatprep.mubr.bf16.mxu0 0
    %697 = vmatmul.mubr.bf16.gmra.mrb[0].mxu0 %v558
    %v698 = vpop.f32.mrb[0].mxu0
    %v699 = vadd.f32 %v650, %v698
    %v700 = vpop.f32.mrb[0].mxu0
    %v701 = vpop.f32.mrb[0].mxu0
    %v702 = vadd.f32 %v653, %v701
    %v703 = vpop.f32.mrb[0].mxu0
    %704 = vdwg.mxu0
    %vm705 = vcmp.eq.s32.totalorder %v89, %v123
    %vm706 = vcmp.eq.s32.totalorder %v90, %v123
    %vm707 = vcmp.eq.s32.totalorder %v91, %v123
    %vm708 = vcmp.eq.s32.totalorder %v92, %v123
    %v709 = vsel %vm705, %v691, 0.0
    %v710 = vsel %vm706, %v694, 0.0
    %v711 = vsel %vm707, %v699, 0.0
    %v712 = vsel %vm708, %v702, 0.0
    %v713 = vsel %vm144, %v709, 0.0
    %v714 = vsel %vm144, %v710, 0.0
    %v715 = vadd.f32 %v713, %v714
    %v716 = vsel %vm144, %v711, 0.0
    %v717 = vadd.f32 %v715, %v716
    %v718 = vsel %vm144, %v712, 0.0
    %v719 = vadd.f32 %v717, %v718
    %720 = vadd.xlane.f32.xlu0 %v719
    %v721 = vpop.xlane.xlu0 %720
    %v722 = vrot.slane %v721, 4
    %v723 = vadd.f32 %v721, %v722
    %v724 = vrot.slane %v723, 2
    %v725 = vadd.f32 %v723, %v724
    %v726 = vrot.slane %v725, 1
    %v727 = vadd.f32 %v725, %v726
    %s728 = vtos %v727
    %v729 = vstv %s728
    %vm730 = vcmask 1040384
    %v731 = vsel %vm730, %v354, 0.0
    %732 = vadd.xlane.f32.xlu0 %v731
    %v733 = vpop.xlane.xlu0 %732
    %v734 = vrot.slane %v733, 4
    %v735 = vadd.f32 %v733, %v734
    %v736 = vrot.slane %v735, 2
    %v737 = vadd.f32 %v735, %v736
    %v738 = vrot.slane %v737, 1
    %v739 = vadd.f32 %v737, %v738
    %s740 = vtos %v739
    %v741 = vld [vmem:[#allocation7] sm:$0x1]
    %v742 = vsub.f32 %v479, %v729
    %v743 = vadd.f32 %v741, %v742
    %vm744 = vcmask 0
    %745 = vst.msk [vmem:[#allocation7] sm:$0x1] %vm744, %v743
    %v746 = vld [vmem:[#allocation8] sm:$0x1]
    %v747 = vstv %s740
    %v748 = vadd.f32 %v746, %v747
    %749 = vst.msk [vmem:[#allocation8] sm:$0x1] %vm744, %v748
    // Predicated region
    $region22: #{tpu_custom_call.1} parent=1 // pred_check
      _
    $region23: #{tpu_custom_call.1} parent=1 // pred_check_branch
      %751 = sbr.rel (0) target = $region25
    $region24: #{tpu_custom_call.1} parent=1 // pred_region
      %s753 = ssub.s32 16, 16
      %754 = vsyncadd [#allocation4], %s753
      %s756 = sshll.u32 [#allocation7], 4
      %s757 = int_to_ptr.vmem [resolvable:$true] %s756
      %759 = dma.vmem_to_hbm [thread:$0]  %s757, 16, %s2, [#allocation4]
    $region25: #{tpu_custom_call.1} parent=1 // pred_fallthru
      _
    // Predicated region
    $region26: #{tpu_custom_call.1} parent=1 // pred_check
      _
    $region27: #{tpu_custom_call.1} parent=1 // pred_check_branch
      %761 = sbr.rel (0) target = $region29
    $region28: #{tpu_custom_call.1} parent=1 // pred_region
      %s763 = ssub.s32 16, 16
      %764 = vsyncadd [#allocation9], %s763
      %s766 = sshll.u32 [#allocation8], 4
      %s767 = int_to_ptr.vmem [resolvable:$true] %s766
      %769 = dma.vmem_to_hbm [thread:$0]  %s767, 16, %s3, [#allocation9]
    $region29: #{tpu_custom_call.1} parent=1 // pred_fallthru
      _
    // Predicated region
    $region30: #{tpu_custom_call.1} parent=1 // pred_check
      _
    $region31: #{tpu_custom_call.1} parent=1 // pred_check_branch
      %771 = sbr.rel (0) target = $region33
    $region32: #{tpu_custom_call.1} parent=1 // pred_region
      %772 = dma.done [#allocation4], 16
    $region33: #{tpu_custom_call.1} parent=1 // pred_fallthru
      _
    // Predicated region
    $region34: #{tpu_custom_call.1} parent=1 // pred_check
      _
    $region35: #{tpu_custom_call.1} parent=1 // pred_check_branch
      %774 = sbr.rel (0) target = $region37
    $region36: #{tpu_custom_call.1} parent=1 // pred_region
      %775 = dma.done [#allocation9], 16
    $region37: #{tpu_custom_call.1} parent=1 // pred_fallthru
      _
    %776 = vsyncpa [#allocation3], 1
    %777 = vsyncpa [#allocation6], 1
    %778 = vsyncpa [#allocation4], 1
    %779 = vsyncpa [#allocation9], 1

</llo_original>
